<compile_context>
chip_gen: v5e
topology: v5e:2x2
jax: 0.10.0
libtpu: 0.0.40
codegen_flags: <defaults>
</compile_context>

<pallas_src>
import functools

import jax
import jax.numpy as jnp
from jax import lax
from jax.experimental import pallas as pl
from jax.experimental.pallas import tpu as pltpu


def _cross_attention_kernel(wemb_ref, pemb_ref, wq_ref, wkv_ref, bias_ref,
                            out_ref, *, num_heads: int, head_dim: int,
                            new_dim: int):
    b = bias_ref[...]                                        # (1, 3*new_dim) f32

    # Q projection.  1/sqrt(head_dim) is pre-folded into wq/bq at prep time;
    # weights arrive bf16, activations cast at the MXU boundary, f32 accumulate.
    q = jnp.dot(wemb_ref[...].astype(jnp.bfloat16), wq_ref[...],
                preferred_element_type=jnp.float32) + b[:, :new_dim]   # (Wt, new_dim)

    # Fused K|V projection: one MXU pass with N = 2*new_dim.  k and v are NOT
    # split out (a lane-32 column split would force masked-select copies);
    # each head is sliced directly from kv below.
    kv = jnp.dot(pemb_ref[...].astype(jnp.bfloat16), wkv_ref[...],
                 preferred_element_type=jnp.float32) + b[:, new_dim:]  # (Pseq, 2*new_dim)

    head_outs = []
    for h in range(num_heads):          # static unroll; heads are contiguous cols
        lo = h * head_dim
        qh = q[:, lo:lo + head_dim].astype(jnp.bfloat16)               # (Wt, hd)
        kh = kv[:, lo:lo + head_dim].astype(jnp.bfloat16)              # (Pseq, hd)
        vh = kv[:, new_dim + lo:new_dim + lo + head_dim].astype(jnp.bfloat16)

        # QK^T contracting directly on head_dim (no kh transpose materialized).
        att = lax.dot_general(qh, kh, (((1,), (1,)), ((), ())),
                              preferred_element_type=jnp.float32)      # (Wt, Pseq)

        # Numerically-stable softmax over keys; all arithmetic kept in f32
        # (v5e VPU/EUP has no bf16); exact normalization for torch parity.
        att = att - jnp.max(att, axis=-1, keepdims=True)
        p = jnp.exp(att)
        p = p / jnp.sum(p, axis=-1, keepdims=True)

        head_outs.append(jnp.dot(p.astype(jnp.bfloat16), vh,
                                 preferred_element_type=jnp.float32))  # (Wt, hd)

    # Single full-width store of the concatenated heads (== torch's
    # .transpose(0,1).contiguous().view(Wseq, -1)).
    out_ref[...] = jnp.concatenate(head_outs, axis=-1).astype(out_ref.dtype)
    # TODO(synk): at production sizes, pack all heads into two block-diagonal
    # MXU matmuls (q@Kbd, P@Vbd) and add an online-softmax "arbitrary" Pseq
    # grid axis; at the shipped shapes the kernel is launch-bound.


def prepare_params(params, *, num_heads: int):
    """One-time (load-time) parameter fusion.

    params: dict with 'wq','bq','wk','bk','wv','bv'
      wq: (Wemb_dim, new_dim), wk/wv: (Pemb_dim, new_dim), biases: (1, new_dim)
    Folds the 1/sqrt(head_dim) attention scale into wq/bq, concatenates the
    K and V projections, packs all biases, and pre-casts weights to bf16.
    """
    new_dim = params["wq"].shape[1]
    assert new_dim % num_heads == 0, "new_dim must be divisible by num_heads"
    head_dim = new_dim // num_heads
    scale = 1.0 / (head_dim ** 0.5)
    wq = (params["wq"] * scale).astype(jnp.bfloat16)                    # (Wemb, new_dim)
    wkv = jnp.concatenate([params["wk"], params["wv"]],
                          axis=1).astype(jnp.bfloat16)                  # (Pemb, 2*new_dim)
    bias = jnp.concatenate([params["bq"] * scale, params["bk"], params["bv"]],
                           axis=1).astype(jnp.float32)                  # (1, 3*new_dim)
    return {"wq": wq, "wkv": wkv, "bias": bias}


def cross_attention(wemb, pemb, prepared, *, num_heads: int, wseq_tile: int = 256):
    """Pallas implementation of CrossAttention.forward (prepared params)."""
    Wseq, Wemb_dim = wemb.shape
    Pseq, Pemb_dim = pemb.shape
    new_dim = prepared["wq"].shape[1]
    head_dim = new_dim // num_heads

    # Row-tile Wseq: keeps VMEM bounded as Wseq grows and lets v7x shard the
    # grid across both TensorCores.  Tile is a sublane multiple (>= 8).
    wseq_tile = max(8, min(wseq_tile, Wseq))
    wseq_tile = (wseq_tile // 8) * 8
    num_tiles = pl.cdiv(Wseq, wseq_tile)
    Wseq_p = num_tiles * wseq_tile
    if Wseq_p != Wseq:
        wemb = jnp.pad(wemb, ((0, Wseq_p - Wseq), (0, 0)))

    kernel = functools.partial(_cross_attention_kernel,
                               num_heads=num_heads, head_dim=head_dim,
                               new_dim=new_dim)

    def resident(arr):                     # whole array, same block every step
        return pl.BlockSpec(arr.shape, lambda i: (0,) * arr.ndim)

    # VMEM budget (double-buffered tiled arrays + resident weights + live
    # intermediates) with headroom, capped so it also fits v7x's 64 MiB VMEM.
    f32 = 4
    per_step = (2 * wseq_tile * Wemb_dim * f32            # wemb tile (x2 buffers)
                + 2 * wseq_tile * new_dim * f32           # output tile (x2 buffers)
                + Pseq * Pemb_dim * f32                   # pemb (resident)
                + prepared["wq"].size * 2                 # bf16 weights (resident)
                + prepared["wkv"].size * 2
                + prepared["bias"].size * f32
                + wseq_tile * (3 * new_dim + Pseq) * f32)  # q, kv, att intermediates
    vmem_limit = int(min(max(4 * per_step, 8 << 20), 32 << 20))

    out = pl.pallas_call(
        kernel,
        out_shape=jax.ShapeDtypeStruct((Wseq_p, new_dim), jnp.float32),
        grid=(num_tiles,),
        in_specs=[
            pl.BlockSpec((wseq_tile, Wemb_dim), lambda i: (i, 0)),
            resident(pemb),
            resident(prepared["wq"]),
            resident(prepared["wkv"]),
            resident(prepared["bias"]),
        ],
        out_specs=pl.BlockSpec((wseq_tile, new_dim), lambda i: (i, 0)),
        compiler_params=pltpu.CompilerParams(
            dimension_semantics=("parallel",),
            vmem_limit_bytes=vmem_limit),
    )(wemb, pemb, prepared["wq"], prepared["wkv"], prepared["bias"])

    return out if Wseq_p == Wseq else out[:Wseq]
    # TODO(synk): new_dim=32 (< 128 lanes) forces masked partial stores; when
    # the model scales, make new_dim a multiple of 128 for lane-dense stores.


def _reference(wemb, pemb, params, *, num_heads: int):
    """Pure-JAX f32 replica of the PyTorch forward, for validation."""
    new_dim = params["wq"].shape[1]
    hd = new_dim // num_heads
    Wseq = wemb.shape[0]
    Pseq = pemb.shape[0]
    q = wemb @ params["wq"] + params["bq"]
    k = pemb @ params["wk"] + params["bk"]
    v = pemb @ params["wv"] + params["bv"]
    q = q.reshape(Wseq, num_heads, hd).transpose(1, 0, 2)
    k = k.reshape(Pseq, num_heads, hd).transpose(1, 0, 2)
    v = v.reshape(Pseq, num_heads, hd).transpose(1, 0, 2)
    att = jnp.einsum("hqd,hkd->hqk", q, k) / (hd ** 0.5)
    p = jax.nn.softmax(att, axis=-1)
    o = jnp.einsum("hqk,hkd->hqd", p, v)
    return o.transpose(1, 0, 2).reshape(Wseq, new_dim)


if __name__ == "__main__":
    # Module config (small): Wemb_dim=32, Pemb_dim=48, new_dim=32, num_heads=4.
    # hidden_dim_ff / voc_size / nn.Embedding are unused in forward().
    Wemb_dim, Pemb_dim, new_dim, num_heads = 32, 48, 32, 4
    Wseq, Pseq = 8, 16

    key = jax.random.PRNGKey(0)
    k_in, k_p, k_wq, k_bq, k_wk, k_bk, k_wv, k_bv = jax.random.split(key, 8)

    wemb = jax.random.normal(k_in, (Wseq, Wemb_dim), dtype=jnp.float32)
    pemb = jax.random.normal(k_p, (Pseq, Pemb_dim), dtype=jnp.float32)

    # Deterministic parameter init (mimics torch.nn.Linear uniform init scale).
    def lin_init(kw, kb, in_dim, out_dim):
        bound = 1.0 / (in_dim ** 0.5)
        w = jax.random.uniform(kw, (in_dim, out_dim), jnp.float32, -bound, bound)
        b = jax.random.uniform(kb, (1, out_dim), jnp.float32, -bound, bound)
        return w, b

    wq, bq = lin_init(k_wq, k_bq, Wemb_dim, new_dim)
    wk, bk = lin_init(k_wk, k_bk, Pemb_dim, new_dim)
    wv, bv = lin_init(k_wv, k_bv, Pemb_dim, new_dim)
    params = dict(wq=wq, bq=bq, wk=wk, bk=bk, wv=wv, bv=bv)

    # One-time parameter fusion (done at load time, not per call).
    prepared = jax.tree_util.tree_map(jax.block_until_ready,
                                      prepare_params(params, num_heads=num_heads))

    out = cross_attention(wemb, pemb, prepared, num_heads=num_heads)
    out = jax.block_until_ready(out)

    ref = _reference(wemb, pemb, params, num_heads=num_heads)
    assert out.shape == (Wseq, new_dim)
    # Tolerance accounts for bf16 MXU operands (f32 accumulation).
    assert jnp.allclose(out, ref, atol=3e-2, rtol=3e-2), "mismatch vs reference"

    # TODO(synk): nn.Embedding table from __init__ is never used in forward(), so it is omitted.
    print("KERNEL_OK")
</pallas_src>

<mosaic_0001>
module attributes {stable_mosaic.version = 11 : i64} {
  func.func @_cross_attention_kernel(%arg0: i32, %arg1: memref<8x32xf32, #tpu.memory_space<vmem>>, %arg2: memref<16x48xf32, #tpu.memory_space<vmem>>, %arg3: memref<32x32xbf16, #tpu.memory_space<vmem>>, %arg4: memref<48x64xbf16, #tpu.memory_space<vmem>>, %arg5: memref<1x96xf32, #tpu.memory_space<vmem>>, %arg6: memref<8x32xf32, #tpu.memory_space<vmem>>) attributes {dimension_semantics = [#tpu.dimension_semantics<parallel>], iteration_bounds = array<i64: 1>, scalar_prefetch = 0 : i64, scratch_operands = 0 : i64, tpu.core_type = #tpu.core_type<tc>, window_params = [{transform_indices = @transform_0, window_bounds = array<i64: 8, 32>}, {pipeline_mode = #tpu.pipeline_mode<synchronous>, transform_indices = @transform_1, window_bounds = array<i64: 16, 48>}, {pipeline_mode = #tpu.pipeline_mode<synchronous>, transform_indices = @transform_2, window_bounds = array<i64: 32, 32>}, {pipeline_mode = #tpu.pipeline_mode<synchronous>, transform_indices = @transform_3, window_bounds = array<i64: 48, 64>}, {pipeline_mode = #tpu.pipeline_mode<synchronous>, transform_indices = @transform_4, window_bounds = array<i64: 1, 96>}, {transform_indices = @transform_5, window_bounds = array<i64: 8, 32>}]} {
    %c0 = arith.constant 0 : index
    %c0_0 = arith.constant 0 : index
    %0 = vector.load %arg5[%c0, %c0_0] : memref<1x96xf32, #tpu.memory_space<vmem>>, vector<1x96xf32>
    %c0_1 = arith.constant 0 : index
    %c0_2 = arith.constant 0 : index
    %1 = vector.load %arg1[%c0_1, %c0_2] : memref<8x32xf32, #tpu.memory_space<vmem>>, vector<8x32xf32>
    %2 = arith.truncf %1 : vector<8x32xf32> to vector<8x32xbf16>
    %c0_3 = arith.constant 0 : index
    %c0_4 = arith.constant 0 : index
    %3 = vector.load %arg3[%c0_3, %c0_4] : memref<32x32xbf16, #tpu.memory_space<vmem>>, vector<32x32xbf16>
    %cst = arith.constant dense<0.000000e+00> : vector<8x32xf32>
    %4 = tpu.matmul %2, %3, %cst {dimension_numbers = #tpu.dot_dimension_numbers<[1], [0], [0], [1], [0, 0, 1, 1], [], []>} : vector<8x32xbf16>, vector<32x32xbf16>, vector<8x32xf32> -> vector<8x32xf32>
    %5 = vector.extract_strided_slice %0 {offsets = [0, 0], sizes = [1, 32], strides = [1, 1]} : vector<1x96xf32> to vector<1x32xf32>
    %6 = vector.broadcast %5 : vector<1x32xf32> to vector<8x32xf32>
    %7 = arith.addf %4, %6 : vector<8x32xf32>
    %c0_5 = arith.constant 0 : index
    %c0_6 = arith.constant 0 : index
    %8 = vector.load %arg2[%c0_5, %c0_6] : memref<16x48xf32, #tpu.memory_space<vmem>>, vector<16x48xf32>
    %9 = arith.truncf %8 : vector<16x48xf32> to vector<16x48xbf16>
    %c0_7 = arith.constant 0 : index
    %c0_8 = arith.constant 0 : index
    %10 = vector.load %arg4[%c0_7, %c0_8] : memref<48x64xbf16, #tpu.memory_space<vmem>>, vector<48x64xbf16>
    %cst_9 = arith.constant dense<0.000000e+00> : vector<16x64xf32>
    %11 = tpu.matmul %9, %10, %cst_9 {dimension_numbers = #tpu.dot_dimension_numbers<[1], [0], [0], [1], [0, 0, 1, 1], [], []>} : vector<16x48xbf16>, vector<48x64xbf16>, vector<16x64xf32> -> vector<16x64xf32>
    %12 = vector.extract_strided_slice %0 {offsets = [0, 32], sizes = [1, 64], strides = [1, 1]} : vector<1x96xf32> to vector<1x64xf32>
    %13 = vector.broadcast %12 : vector<1x64xf32> to vector<16x64xf32>
    %14 = arith.addf %11, %13 : vector<16x64xf32>
    %15 = vector.extract_strided_slice %7 {offsets = [0, 0], sizes = [8, 8], strides = [1, 1]} : vector<8x32xf32> to vector<8x8xf32>
    %16 = arith.truncf %15 : vector<8x8xf32> to vector<8x8xbf16>
    %17 = vector.extract_strided_slice %14 {offsets = [0, 0], sizes = [16, 8], strides = [1, 1]} : vector<16x64xf32> to vector<16x8xf32>
    %18 = arith.truncf %17 : vector<16x8xf32> to vector<16x8xbf16>
    %19 = vector.extract_strided_slice %14 {offsets = [0, 32], sizes = [16, 8], strides = [1, 1]} : vector<16x64xf32> to vector<16x8xf32>
    %20 = arith.truncf %19 : vector<16x8xf32> to vector<16x8xbf16>
    %cst_10 = arith.constant dense<0.000000e+00> : vector<8x16xf32>
    %21 = tpu.matmul %16, %18, %cst_10 {dimension_numbers = #tpu.dot_dimension_numbers<[1], [1], [0], [0], [0, 0, 1, 0], [], []>} : vector<8x8xbf16>, vector<16x8xbf16>, vector<8x16xf32> -> vector<8x16xf32>
    %cst_11 = arith.constant dense<0xFF800000> : vector<8xf32>
    %22 = vector.multi_reduction <maximumf>, %21, %cst_11 [1] : vector<8x16xf32> to vector<8xf32>
    %23 = vector.shape_cast %22 : vector<8xf32> to vector<8x1xf32>
    %24 = vector.broadcast %23 : vector<8x1xf32> to vector<8x16xf32>
    %25 = arith.subf %21, %24 : vector<8x16xf32>
    %26 = math.exp %25 : vector<8x16xf32>
    %cst_12 = arith.constant dense<0.000000e+00> : vector<8xf32>
    %27 = vector.multi_reduction <add>, %26, %cst_12 [1] : vector<8x16xf32> to vector<8xf32>
    %28 = vector.shape_cast %27 : vector<8xf32> to vector<8x1xf32>
    %29 = vector.broadcast %28 : vector<8x1xf32> to vector<8x16xf32>
    %30 = arith.divf %26, %29 : vector<8x16xf32>
    %31 = arith.truncf %30 : vector<8x16xf32> to vector<8x16xbf16>
    %cst_13 = arith.constant dense<0.000000e+00> : vector<8x8xf32>
    %32 = tpu.matmul %31, %20, %cst_13 {dimension_numbers = #tpu.dot_dimension_numbers<[1], [0], [0], [1], [0, 0, 1, 1], [], []>} : vector<8x16xbf16>, vector<16x8xbf16>, vector<8x8xf32> -> vector<8x8xf32>
    %33 = vector.extract_strided_slice %7 {offsets = [0, 8], sizes = [8, 8], strides = [1, 1]} : vector<8x32xf32> to vector<8x8xf32>
    %34 = arith.truncf %33 : vector<8x8xf32> to vector<8x8xbf16>
    %35 = vector.extract_strided_slice %14 {offsets = [0, 8], sizes = [16, 8], strides = [1, 1]} : vector<16x64xf32> to vector<16x8xf32>
    %36 = arith.truncf %35 : vector<16x8xf32> to vector<16x8xbf16>
    %37 = vector.extract_strided_slice %14 {offsets = [0, 40], sizes = [16, 8], strides = [1, 1]} : vector<16x64xf32> to vector<16x8xf32>
    %38 = arith.truncf %37 : vector<16x8xf32> to vector<16x8xbf16>
    %cst_14 = arith.constant dense<0.000000e+00> : vector<8x16xf32>
    %39 = tpu.matmul %34, %36, %cst_14 {dimension_numbers = #tpu.dot_dimension_numbers<[1], [1], [0], [0], [0, 0, 1, 0], [], []>} : vector<8x8xbf16>, vector<16x8xbf16>, vector<8x16xf32> -> vector<8x16xf32>
    %cst_15 = arith.constant dense<0xFF800000> : vector<8xf32>
    %40 = vector.multi_reduction <maximumf>, %39, %cst_15 [1] : vector<8x16xf32> to vector<8xf32>
    %41 = vector.shape_cast %40 : vector<8xf32> to vector<8x1xf32>
    %42 = vector.broadcast %41 : vector<8x1xf32> to vector<8x16xf32>
    %43 = arith.subf %39, %42 : vector<8x16xf32>
    %44 = math.exp %43 : vector<8x16xf32>
    %cst_16 = arith.constant dense<0.000000e+00> : vector<8xf32>
    %45 = vector.multi_reduction <add>, %44, %cst_16 [1] : vector<8x16xf32> to vector<8xf32>
    %46 = vector.shape_cast %45 : vector<8xf32> to vector<8x1xf32>
    %47 = vector.broadcast %46 : vector<8x1xf32> to vector<8x16xf32>
    %48 = arith.divf %44, %47 : vector<8x16xf32>
    %49 = arith.truncf %48 : vector<8x16xf32> to vector<8x16xbf16>
    %cst_17 = arith.constant dense<0.000000e+00> : vector<8x8xf32>
    %50 = tpu.matmul %49, %38, %cst_17 {dimension_numbers = #tpu.dot_dimension_numbers<[1], [0], [0], [1], [0, 0, 1, 1], [], []>} : vector<8x16xbf16>, vector<16x8xbf16>, vector<8x8xf32> -> vector<8x8xf32>
    %51 = vector.extract_strided_slice %7 {offsets = [0, 16], sizes = [8, 8], strides = [1, 1]} : vector<8x32xf32> to vector<8x8xf32>
    %52 = arith.truncf %51 : vector<8x8xf32> to vector<8x8xbf16>
    %53 = vector.extract_strided_slice %14 {offsets = [0, 16], sizes = [16, 8], strides = [1, 1]} : vector<16x64xf32> to vector<16x8xf32>
    %54 = arith.truncf %53 : vector<16x8xf32> to vector<16x8xbf16>
    %55 = vector.extract_strided_slice %14 {offsets = [0, 48], sizes = [16, 8], strides = [1, 1]} : vector<16x64xf32> to vector<16x8xf32>
    %56 = arith.truncf %55 : vector<16x8xf32> to vector<16x8xbf16>
    %cst_18 = arith.constant dense<0.000000e+00> : vector<8x16xf32>
    %57 = tpu.matmul %52, %54, %cst_18 {dimension_numbers = #tpu.dot_dimension_numbers<[1], [1], [0], [0], [0, 0, 1, 0], [], []>} : vector<8x8xbf16>, vector<16x8xbf16>, vector<8x16xf32> -> vector<8x16xf32>
    %cst_19 = arith.constant dense<0xFF800000> : vector<8xf32>
    %58 = vector.multi_reduction <maximumf>, %57, %cst_19 [1] : vector<8x16xf32> to vector<8xf32>
    %59 = vector.shape_cast %58 : vector<8xf32> to vector<8x1xf32>
    %60 = vector.broadcast %59 : vector<8x1xf32> to vector<8x16xf32>
    %61 = arith.subf %57, %60 : vector<8x16xf32>
    %62 = math.exp %61 : vector<8x16xf32>
    %cst_20 = arith.constant dense<0.000000e+00> : vector<8xf32>
    %63 = vector.multi_reduction <add>, %62, %cst_20 [1] : vector<8x16xf32> to vector<8xf32>
    %64 = vector.shape_cast %63 : vector<8xf32> to vector<8x1xf32>
    %65 = vector.broadcast %64 : vector<8x1xf32> to vector<8x16xf32>
    %66 = arith.divf %62, %65 : vector<8x16xf32>
    %67 = arith.truncf %66 : vector<8x16xf32> to vector<8x16xbf16>
    %cst_21 = arith.constant dense<0.000000e+00> : vector<8x8xf32>
    %68 = tpu.matmul %67, %56, %cst_21 {dimension_numbers = #tpu.dot_dimension_numbers<[1], [0], [0], [1], [0, 0, 1, 1], [], []>} : vector<8x16xbf16>, vector<16x8xbf16>, vector<8x8xf32> -> vector<8x8xf32>
    %69 = vector.extract_strided_slice %7 {offsets = [0, 24], sizes = [8, 8], strides = [1, 1]} : vector<8x32xf32> to vector<8x8xf32>
    %70 = arith.truncf %69 : vector<8x8xf32> to vector<8x8xbf16>
    %71 = vector.extract_strided_slice %14 {offsets = [0, 24], sizes = [16, 8], strides = [1, 1]} : vector<16x64xf32> to vector<16x8xf32>
    %72 = arith.truncf %71 : vector<16x8xf32> to vector<16x8xbf16>
    %73 = vector.extract_strided_slice %14 {offsets = [0, 56], sizes = [16, 8], strides = [1, 1]} : vector<16x64xf32> to vector<16x8xf32>
    %74 = arith.truncf %73 : vector<16x8xf32> to vector<16x8xbf16>
    %cst_22 = arith.constant dense<0.000000e+00> : vector<8x16xf32>
    %75 = tpu.matmul %70, %72, %cst_22 {dimension_numbers = #tpu.dot_dimension_numbers<[1], [1], [0], [0], [0, 0, 1, 0], [], []>} : vector<8x8xbf16>, vector<16x8xbf16>, vector<8x16xf32> -> vector<8x16xf32>
    %cst_23 = arith.constant dense<0xFF800000> : vector<8xf32>
    %76 = vector.multi_reduction <maximumf>, %75, %cst_23 [1] : vector<8x16xf32> to vector<8xf32>
    %77 = vector.shape_cast %76 : vector<8xf32> to vector<8x1xf32>
    %78 = vector.broadcast %77 : vector<8x1xf32> to vector<8x16xf32>
    %79 = arith.subf %75, %78 : vector<8x16xf32>
    %80 = math.exp %79 : vector<8x16xf32>
    %cst_24 = arith.constant dense<0.000000e+00> : vector<8xf32>
    %81 = vector.multi_reduction <add>, %80, %cst_24 [1] : vector<8x16xf32> to vector<8xf32>
    %82 = vector.shape_cast %81 : vector<8xf32> to vector<8x1xf32>
    %83 = vector.broadcast %82 : vector<8x1xf32> to vector<8x16xf32>
    %84 = arith.divf %80, %83 : vector<8x16xf32>
    %85 = arith.truncf %84 : vector<8x16xf32> to vector<8x16xbf16>
    %cst_25 = arith.constant dense<0.000000e+00> : vector<8x8xf32>
    %86 = tpu.matmul %85, %74, %cst_25 {dimension_numbers = #tpu.dot_dimension_numbers<[1], [0], [0], [1], [0, 0, 1, 1], [], []>} : vector<8x16xbf16>, vector<16x8xbf16>, vector<8x8xf32> -> vector<8x8xf32>
    %87 = tpu.concatenate %32, %50, %68, %86 in 1 : vector<8x8xf32>, vector<8x8xf32>, vector<8x8xf32>, vector<8x8xf32> -> vector<8x32xf32>
    %c0_26 = arith.constant 0 : index
    %c0_27 = arith.constant 0 : index
    %88 = vector.load %arg6[%c0_26, %c0_27] : memref<8x32xf32, #tpu.memory_space<vmem>>, vector<8x32xf32>
    tpu.vector_store %arg6[%c0_26, %c0_27], %87 {strides = array<i32>} : memref<8x32xf32, #tpu.memory_space<vmem>>, vector<8x32xf32>,
    return
  }
  func.func @transform_0(%arg0: i32) -> (i32, i32) {
    %c0_i32 = arith.constant 0 : i32
    %c0_i32_0 = arith.constant 0 : i32
    return %arg0, %c0_i32 : i32, i32
  }
  func.func @transform_1(%arg0: i32) -> (i32, i32) {
    %c0_i32 = arith.constant 0 : i32
    %c0_i32_0 = arith.constant 0 : i32
    %c0_i32_1 = arith.constant 0 : i32
    return %c0_i32, %c0_i32_0 : i32, i32
  }
  func.func @transform_2(%arg0: i32) -> (i32, i32) {
    %c0_i32 = arith.constant 0 : i32
    %c0_i32_0 = arith.constant 0 : i32
    %c0_i32_1 = arith.constant 0 : i32
    return %c0_i32, %c0_i32_0 : i32, i32
  }
  func.func @transform_3(%arg0: i32) -> (i32, i32) {
    %c0_i32 = arith.constant 0 : i32
    %c0_i32_0 = arith.constant 0 : i32
    %c0_i32_1 = arith.constant 0 : i32
    return %c0_i32, %c0_i32_0 : i32, i32
  }
  func.func @transform_4(%arg0: i32) -> (i32, i32) {
    %c0_i32 = arith.constant 0 : i32
    %c0_i32_0 = arith.constant 0 : i32
    %c0_i32_1 = arith.constant 0 : i32
    return %c0_i32, %c0_i32_0 : i32, i32
  }
  func.func @transform_5(%arg0: i32) -> (i32, i32) {
    %c0_i32 = arith.constant 0 : i32
    %c0_i32_0 = arith.constant 0 : i32
    return %arg0, %c0_i32 : i32, i32
  }
}

</mosaic_0001>

<llo_original>
// kernel: tpu_custom_call.1
$region0: #{tpu_custom_call.1}
  #allocation0 [shape = 'u32[]', space=smem, size = 0x4, offset = 0x4, fixed_abs, tag = 'smem constant byte address 0x4 - core index']
  #allocation1 [shape = 'u32[72,128]{1,0:T(1,128)}', space=vmem, size = 0x9000, scoped, tag = 'internal scratch']
  %s0 = inlined_call_operand.hbm [shape: f32[8,32], index: 0, kind: input, shape index: {}]
  %s1 = inlined_call_operand.hbm [shape: f32[16,48], index: 1, kind: input, shape index: {}]
  %s2 = inlined_call_operand.hbm [shape: bf16[32,32], index: 2, kind: input, shape index: {}]
  %s3 = inlined_call_operand.hbm [shape: bf16[48,64], index: 3, kind: input, shape index: {}]
  %s4 = inlined_call_operand.vmem [shape: f32[1,96], index: 4, kind: input, shape index: {}]
  %s5 = inlined_call_operand.hbm [shape: f32[8,32], index: 5, kind: output, shape index: {}]
  %s6 = sld [smem:[#allocation0]]
  $region46: #{tpu_custom_call.1} parent=0
    _
  %s8 = ssub.s32 1, %s6
  %s9 = scalar_select 0, %s8, %s6
  $region1: #{tpu_custom_call.1} parent=0
    #allocation2 [shape = 'u8[4096]{0}', space=vmem, size = 0x1000, scoped, tag = 'input window, operand 0, single buffered']
    #allocation3 [shape = 's32[1]{0}', space=sflag, size = 0x4, scoped, tag = 'scoped memory for tpu_custom_call.1']
    #allocation4 [shape = 's32[1]{0}', space=sflag, size = 0x4, scoped, tag = 'scoped memory for tpu_custom_call.1']
    #allocation5 [shape = 'u8[8192]{0}', space=vmem, size = 0x2000, scoped, tag = 'input window, operand 1, single buffered']
    #allocation6 [shape = 's32[1]{0}', space=sflag, size = 0x4, scoped, tag = 'scoped memory for tpu_custom_call.1']
    #allocation7 [shape = 'u8[8192]{0}', space=vmem, size = 0x2000, scoped, tag = 'input window, operand 2, single buffered']
    #allocation8 [shape = 'u8[12288]{0}', space=vmem, size = 0x3000, scoped, tag = 'input window, operand 3, single buffered']
    #allocation9 [shape = 's32[1]{0}', space=sflag, size = 0x4, scoped, tag = 'scoped memory for tpu_custom_call.1']
    #allocation10 [shape = 'u8[4096]{0}', space=vmem, size = 0x1000, scoped, tag = 'output window, operand 0, single buffered']
    %10 = vsyncpa [#allocation3], 0
    %11 = vsyncpa [#allocation6], 0
    %12 = vsyncpa [#allocation9], 0
    %13 = vsyncpa [#allocation4], 0
    // Predicated region
    $region2: #{tpu_custom_call.1} parent=1 // pred_check
      _
    $region3: #{tpu_custom_call.1} parent=1 // pred_check_branch
      %15 = sbr.rel (0) target = $region5
    $region4: #{tpu_custom_call.1} parent=1 // pred_region
      %17 = vsyncadd [#allocation3], 0
      %s19 = sshll.u32 %s0, 4
      %s20 = int_to_ptr.hbm [resolvable:$true] %s19
      %s21 = sshll.u32 [#allocation2], 4
      %s22 = int_to_ptr.vmem [resolvable:$true] %s21
      %24 = dma.hbm_to_vmem [thread:$0]  %s20, 128, %s22, [#allocation3]
    $region5: #{tpu_custom_call.1} parent=1 // pred_fallthru
      _
    // Predicated region
    $region6: #{tpu_custom_call.1} parent=1 // pred_check
      _
    $region7: #{tpu_custom_call.1} parent=1 // pred_check_branch
      %26 = sbr.rel (0) target = $region9
    $region8: #{tpu_custom_call.1} parent=1 // pred_region
      %28 = vsyncadd [#allocation6], 0
      %s29 = sshll.u32 %s1, 4
      %s30 = int_to_ptr.hbm [resolvable:$true] %s29
      %s31 = sshll.u32 [#allocation5], 4
      %s32 = int_to_ptr.vmem [resolvable:$true] %s31
      %37 = dma.hbm_to_vmem [thread:$0]  %s30, 256, %s32, [#allocation6], 128, 128, 8
    $region9: #{tpu_custom_call.1} parent=1 // pred_fallthru
      _
    // Predicated region
    $region10: #{tpu_custom_call.1} parent=1 // pred_check
      _
    $region11: #{tpu_custom_call.1} parent=1 // pred_check_branch
      %39 = sbr.rel (0) target = $region13
    $region12: #{tpu_custom_call.1} parent=1 // pred_region
      %41 = vsyncadd [#allocation6], 0
      %s42 = sshll.u32 %s2, 4
      %s43 = int_to_ptr.hbm [resolvable:$true] %s42
      %s44 = sshll.u32 [#allocation7], 4
      %s45 = int_to_ptr.vmem [resolvable:$true] %s44
      %50 = dma.hbm_to_vmem [thread:$0]  %s43, 256, %s45, [#allocation6], 64, 64, 4
    $region13: #{tpu_custom_call.1} parent=1 // pred_fallthru
      _
    // Predicated region
    $region14: #{tpu_custom_call.1} parent=1 // pred_check
      _
    $region15: #{tpu_custom_call.1} parent=1 // pred_check_branch
      %52 = sbr.rel (0) target = $region17
    $region16: #{tpu_custom_call.1} parent=1 // pred_region
      %54 = vsyncadd [#allocation9], 0
      %s55 = sshll.u32 %s3, 4
      %s56 = int_to_ptr.hbm [resolvable:$true] %s55
      %s57 = sshll.u32 [#allocation8], 4
      %s58 = int_to_ptr.vmem [resolvable:$true] %s57
      %63 = dma.hbm_to_vmem [thread:$0]  %s56, 384, %s58, [#allocation9], 64, 64, 4
    $region17: #{tpu_custom_call.1} parent=1 // pred_fallthru
      _
    // Predicated region
    $region18: #{tpu_custom_call.1} parent=1 // pred_check
      _
    $region19: #{tpu_custom_call.1} parent=1 // pred_check_branch
      %65 = sbr.rel (0) target = $region21
    $region20: #{tpu_custom_call.1} parent=1 // pred_region
      _
    $region21: #{tpu_custom_call.1} parent=1 // pred_fallthru
      _
    // Predicated region
    $region22: #{tpu_custom_call.1} parent=1 // pred_check
      _
    $region23: #{tpu_custom_call.1} parent=1 // pred_check_branch
      %67 = sbr.rel (0) target = $region25
    $region24: #{tpu_custom_call.1} parent=1 // pred_region
      %69 = dma.done [#allocation3], 128
    $region25: #{tpu_custom_call.1} parent=1 // pred_fallthru
      _
    // Predicated region
    $region26: #{tpu_custom_call.1} parent=1 // pred_check
      _
    $region27: #{tpu_custom_call.1} parent=1 // pred_check_branch
      %71 = sbr.rel (0) target = $region29
    $region28: #{tpu_custom_call.1} parent=1 // pred_region
      %73 = dma.done [#allocation6], 256
    $region29: #{tpu_custom_call.1} parent=1 // pred_fallthru
      _
    // Predicated region
    $region30: #{tpu_custom_call.1} parent=1 // pred_check
      _
    $region31: #{tpu_custom_call.1} parent=1 // pred_check_branch
      %75 = sbr.rel (0) target = $region33
    $region32: #{tpu_custom_call.1} parent=1 // pred_region
      %77 = dma.done [#allocation6], 256
    $region33: #{tpu_custom_call.1} parent=1 // pred_fallthru
      _
    // Predicated region
    $region34: #{tpu_custom_call.1} parent=1 // pred_check
      _
    $region35: #{tpu_custom_call.1} parent=1 // pred_check_branch
      %79 = sbr.rel (0) target = $region37
    $region36: #{tpu_custom_call.1} parent=1 // pred_region
      %81 = dma.done [#allocation9], 384
    $region37: #{tpu_custom_call.1} parent=1 // pred_fallthru
      _
    %v83 = vld [vmem:[%s4] sm:$0x1]
    %v84 = vld [vmem:[#allocation2] sm:$0xff]
    %v85 = vpack.c.bf16 %v84, %v84
    %v86 = vld [vmem:[#allocation7] sm:$0xf]
    %v87 = vld [vmem:[#allocation7 + $0x4] sm:$0xf]
    %v88 = vld [vmem:[#allocation7 + $0x8] sm:$0xf]
    %v89 = vld [vmem:[#allocation7 + $0xc] sm:$0xf]
    %v91 = vperm.slane %v83, 0
    %v97 = vunpack.c.l.b16 %v86
    %v98 = vunpack.c.l.b16 %v87
    %v99 = vunpack.c.l.b16 %v88
    %v100 = vunpack.c.l.b16 %v89
    %v101 = vpack.c.b16 %v98, %v97
    %v102 = vpack.c.b16 %v100, %v99
    %vm105 = vcmask 261120
    %v107 = vsel %vm105, %v85, 0
    %109 = vmatpush.bf16.msra.mxu0 0
    %110 = vmatpush.bf16.msra.mxu0 0
    %111 = vmatpush.bf16.msra.mxu0 0
    %112 = vmatpush.bf16.msra.mxu0 0
    %113 = vmatpush.bf16.msra.mxu0 0
    %114 = vmatpush.bf16.msra.mxu0 0
    %115 = vmatpush.bf16.msra.mxu0 %v102
    %116 = vmatpush.bf16.msra.mxu0 %v101
    %117 = vmatmul.bf16.gmra.mxu0 %v107
    %v118 = vpop.f32.mrf.mxu0
    %v119 = vadd.f32 %v91, %v118
    %v120 = vpop.f32.mrf.mxu0
    %121 = vdwg.mxu0
    %v122 = vld [vmem:[#allocation5] sm:$0xff]
    %v123 = vld [vmem:[#allocation5 + $0x8] sm:$0xff]
    %v124 = vpack.c.bf16 %v123, %v122
    %v125 = vld [vmem:[#allocation8] sm:$0xf]
    %v126 = vld [vmem:[#allocation8 + $0x4] sm:$0xf]
    %v127 = vld [vmem:[#allocation8 + $0x8] sm:$0xf]
    %v128 = vld [vmem:[#allocation8 + $0xc] sm:$0xf]
    %v129 = vld [vmem:[#allocation8 + $0x10] sm:$0xf]
    %v130 = vld [vmem:[#allocation8 + $0x14] sm:$0xf]
    %v137 = vunpack.c.l.b16 %v125
    %v138 = vunpack.c.l.b16 %v126
    %v139 = vunpack.c.l.b16 %v127
    %v140 = vunpack.c.l.b16 %v128
    %v141 = vunpack.c.l.b16 %v129
    %v142 = vunpack.c.l.b16 %v130
    %v143 = vpack.c.b16 %v138, %v137
    %v144 = vpack.c.b16 %v140, %v139
    %v145 = vpack.c.b16 %v142, %v141
    %149 = vrot.lane.b32.xlu0 %v91, 96
    %v150 = vpop.permute.xlu0 %149
    %vm152 = vcmask 392192
    %v154 = vsel %vm152, %v124, 0
    %156 = vmatpush.bf16.msra.mxu0 0
    %157 = vmatpush.bf16.msra.mxu0 0
    %158 = vmatpush.bf16.msra.mxu0 0
    %159 = vmatpush.bf16.msra.mxu0 0
    %160 = vmatpush.bf16.msra.mxu0 0
    %161 = vmatpush.bf16.msra.mxu0 %v145
    %162 = vmatpush.bf16.msra.mxu0 %v144
    %163 = vmatpush.bf16.msra.mxu0 %v143
    %164 = vmatmul.bf16.gmra.mxu0 %v154
    %v165 = vpop.f32.mrf.mxu0
    %v166 = vadd.f32 %v150, %v165
    %v167 = vpop.f32.mrf.mxu0
    %v168 = vadd.f32 %v150, %v167
    %169 = vdwg.mxu0
    %v170 = vpack.c.bf16 %v119, %v119
    %v171 = vpack.c.bf16 %v168, %v166
    %vm172 = vcmask 64512
    %v174 = vsel %vm172, %v170, 0
    %v177 = vsel %vm172, %v171, 0
    %179 = vmatpush.bf16.xpose.msra.mxu0 0
    %180 = vmatpush.bf16.xpose.msra.mxu0 0
    %181 = vmatpush.bf16.xpose.msra.mxu0 0
    %182 = vmatpush.bf16.xpose.msra.mxu0 0
    %183 = vmatpush.bf16.xpose.msra.mxu0 0
    %184 = vmatpush.bf16.xpose.msra.mxu0 0
    %185 = vmatpush.bf16.xpose.msra.mxu0 0
    %186 = vmatpush.bf16.xpose.msra.mxu0 %v177
    %187 = vmatmul.bf16.gmra.mxu0 %v174
    %v188 = vpop.f32.mrf.mxu0
    %v189 = vadd.f32 0.0, %v188
    %v190 = vpop.f32.mrf.mxu0
    %191 = vdwg.mxu0
    %vm192 = vcmask 130048
    %v193 = vsel %vm192, %v189, -inf
    %194 = vmax.xlane.f32.xlu0 %v193
    %v195 = vpop.xlane.xlu0 %194
    %v196 = vsub.f32 %v189, %v195
    %v197 = vmul.f32 %v196, 1.442695
    %v198 = vpow.pop %v197
    %v199 = vsel %vm192, %v198, 0.0
    %200 = vadd.xlane.f32.xlu0 %v199
    %v201 = vpop.xlane.xlu0 %200
    %v202 = vrcp.pop %v201
    %v203 = vmul.f32 %v201, %v202
    %v204 = vsub.f32 1.0, %v203
    %v205 = vmul.f32 %v202, %v204
    %v206 = vadd.f32 %v202, %v205
    %vm207 = vweird.f32 %v201
    %vm208 = vweird.f32 %v202
    %vm209 = vmor %vm207, %vm208
    %v210 = vsel %vm209, %v202, %v206
    %v211 = vand.u32 2147483647, %v201
    %vm212 = vcmp.eq.f32.partialorder %v211, 8.507059e+37
    %v213 = vand.u32 %v201, 2147483648
    %v214 = vor.u32 1.1754944e-38, %v213
    %v215 = vsel %vm212, %v214, %v210
    %v216 = vmul.f32 %v198, %v215
    %v217 = vpack.c.bf16 %v216, %v216
    %219 = vrot.lane.b32.xlu0 %v171, 96
    %v220 = vpop.permute.xlu0 %219
    %v223 = vsel %vm192, %v217, 0
    %225 = vmatpush.bf16.msra.mxu0 0
    %226 = vmatpush.bf16.msra.mxu0 0
    %227 = vmatpush.bf16.msra.mxu0 0
    %228 = vmatpush.bf16.msra.mxu0 0
    %229 = vmatpush.bf16.msra.mxu0 0
    %230 = vmatpush.bf16.msra.mxu0 0
    %231 = vmatpush.bf16.msra.mxu0 0
    %232 = vmatpush.bf16.msra.mxu0 %v220
    %233 = vmatmul.bf16.gmra.mxu0 %v223
    %v234 = vpop.f32.mrf.mxu0
    %v235 = vadd.f32 0.0, %v234
    %v236 = vpop.f32.mrf.mxu0
    %237 = vdwg.mxu0
    %239 = vrot.lane.b32.xlu0 %v170, 120
    %v240 = vpop.permute.xlu0 %239
    %241 = vrot.lane.b32.xlu0 %v171, 120
    %v242 = vpop.permute.xlu0 %241
    %v244 = vsel %vm172, %v240, 0
    %v247 = vsel %vm172, %v242, 0
    %249 = vmatpush.bf16.xpose.msra.mxu0 0
    %250 = vmatpush.bf16.xpose.msra.mxu0 0
    %251 = vmatpush.bf16.xpose.msra.mxu0 0
    %252 = vmatpush.bf16.xpose.msra.mxu0 0
    %253 = vmatpush.bf16.xpose.msra.mxu0 0
    %254 = vmatpush.bf16.xpose.msra.mxu0 0
    %255 = vmatpush.bf16.xpose.msra.mxu0 0
    %256 = vmatpush.bf16.xpose.msra.mxu0 %v247
    %257 = vmatmul.bf16.gmra.mxu0 %v244
    %v258 = vpop.f32.mrf.mxu0
    %v259 = vadd.f32 0.0, %v258
    %v260 = vpop.f32.mrf.mxu0
    %261 = vdwg.mxu0
    %v262 = vsel %vm192, %v259, -inf
    %263 = vmax.xlane.f32.xlu0 %v262
    %v264 = vpop.xlane.xlu0 %263
    %v265 = vsub.f32 %v259, %v264
    %v266 = vmul.f32 %v265, 1.442695
    %v267 = vpow.pop %v266
    %v268 = vsel %vm192, %v267, 0.0
    %269 = vadd.xlane.f32.xlu0 %v268
    %v270 = vpop.xlane.xlu0 %269
    %v271 = vrcp.pop %v270
    %v272 = vmul.f32 %v270, %v271
    %v273 = vsub.f32 1.0, %v272
    %v274 = vmul.f32 %v271, %v273
    %v275 = vadd.f32 %v271, %v274
    %vm276 = vweird.f32 %v270
    %vm277 = vweird.f32 %v271
    %vm278 = vmor %vm276, %vm277
    %v279 = vsel %vm278, %v271, %v275
    %v280 = vand.u32 2147483647, %v270
    %vm281 = vcmp.eq.f32.partialorder %v280, 8.507059e+37
    %v282 = vand.u32 %v270, 2147483648
    %v283 = vor.u32 1.1754944e-38, %v282
    %v284 = vsel %vm281, %v283, %v279
    %v285 = vmul.f32 %v267, %v284
    %v286 = vpack.c.bf16 %v285, %v285
    %287 = vrot.lane.b32.xlu0 %v171, 88
    %v288 = vpop.permute.xlu0 %287
    %v291 = vsel %vm192, %v286, 0
    %293 = vmatpush.bf16.msra.mxu0 0
    %294 = vmatpush.bf16.msra.mxu0 0
    %295 = vmatpush.bf16.msra.mxu0 0
    %296 = vmatpush.bf16.msra.mxu0 0
    %297 = vmatpush.bf16.msra.mxu0 0
    %298 = vmatpush.bf16.msra.mxu0 0
    %299 = vmatpush.bf16.msra.mxu0 0
    %300 = vmatpush.bf16.msra.mxu0 %v288
    %301 = vmatmul.bf16.gmra.mxu0 %v291
    %v302 = vpop.f32.mrf.mxu0
    %v303 = vadd.f32 0.0, %v302
    %v304 = vpop.f32.mrf.mxu0
    %305 = vdwg.mxu0
    %306 = vrot.lane.b32.xlu0 %v170, 112
    %v307 = vpop.permute.xlu0 %306
    %308 = vrot.lane.b32.xlu0 %v171, 112
    %v309 = vpop.permute.xlu0 %308
    %v311 = vsel %vm172, %v307, 0
    %v314 = vsel %vm172, %v309, 0
    %316 = vmatpush.bf16.xpose.msra.mxu0 0
    %317 = vmatpush.bf16.xpose.msra.mxu0 0
    %318 = vmatpush.bf16.xpose.msra.mxu0 0
    %319 = vmatpush.bf16.xpose.msra.mxu0 0
    %320 = vmatpush.bf16.xpose.msra.mxu0 0
    %321 = vmatpush.bf16.xpose.msra.mxu0 0
    %322 = vmatpush.bf16.xpose.msra.mxu0 0
    %323 = vmatpush.bf16.xpose.msra.mxu0 %v314
    %324 = vmatmul.bf16.gmra.mxu0 %v311
    %v325 = vpop.f32.mrf.mxu0
    %v326 = vadd.f32 0.0, %v325
    %v327 = vpop.f32.mrf.mxu0
    %328 = vdwg.mxu0
    %v329 = vsel %vm192, %v326, -inf
    %330 = vmax.xlane.f32.xlu0 %v329
    %v331 = vpop.xlane.xlu0 %330
    %v332 = vsub.f32 %v326, %v331
    %v333 = vmul.f32 %v332, 1.442695
    %v334 = vpow.pop %v333
    %v335 = vsel %vm192, %v334, 0.0
    %336 = vadd.xlane.f32.xlu0 %v335
    %v337 = vpop.xlane.xlu0 %336
    %v338 = vrcp.pop %v337
    %v339 = vmul.f32 %v337, %v338
    %v340 = vsub.f32 1.0, %v339
    %v341 = vmul.f32 %v338, %v340
    %v342 = vadd.f32 %v338, %v341
    %vm343 = vweird.f32 %v337
    %vm344 = vweird.f32 %v338
    %vm345 = vmor %vm343, %vm344
    %v346 = vsel %vm345, %v338, %v342
    %v347 = vand.u32 2147483647, %v337
    %vm348 = vcmp.eq.f32.partialorder %v347, 8.507059e+37
    %v349 = vand.u32 %v337, 2147483648
    %v350 = vor.u32 1.1754944e-38, %v349
    %v351 = vsel %vm348, %v350, %v346
    %v352 = vmul.f32 %v334, %v351
    %v353 = vpack.c.bf16 %v352, %v352
    %354 = vrot.lane.b32.xlu0 %v171, 80
    %v355 = vpop.permute.xlu0 %354
    %v358 = vsel %vm192, %v353, 0
    %360 = vmatpush.bf16.msra.mxu0 0
    %361 = vmatpush.bf16.msra.mxu0 0
    %362 = vmatpush.bf16.msra.mxu0 0
    %363 = vmatpush.bf16.msra.mxu0 0
    %364 = vmatpush.bf16.msra.mxu0 0
    %365 = vmatpush.bf16.msra.mxu0 0
    %366 = vmatpush.bf16.msra.mxu0 0
    %367 = vmatpush.bf16.msra.mxu0 %v355
    %368 = vmatmul.bf16.gmra.mxu0 %v358
    %v369 = vpop.f32.mrf.mxu0
    %v370 = vadd.f32 0.0, %v369
    %v371 = vpop.f32.mrf.mxu0
    %372 = vdwg.mxu0
    %373 = vrot.lane.b32.xlu0 %v170, 104
    %v374 = vpop.permute.xlu0 %373
    %375 = vrot.lane.b32.xlu0 %v171, 104
    %v376 = vpop.permute.xlu0 %375
    %v378 = vsel %vm172, %v374, 0
    %v381 = vsel %vm172, %v376, 0
    %383 = vmatpush.bf16.xpose.msra.mxu0 0
    %384 = vmatpush.bf16.xpose.msra.mxu0 0
    %385 = vmatpush.bf16.xpose.msra.mxu0 0
    %386 = vmatpush.bf16.xpose.msra.mxu0 0
    %387 = vmatpush.bf16.xpose.msra.mxu0 0
    %388 = vmatpush.bf16.xpose.msra.mxu0 0
    %389 = vmatpush.bf16.xpose.msra.mxu0 0
    %390 = vmatpush.bf16.xpose.msra.mxu0 %v381
    %391 = vmatmul.bf16.gmra.mxu0 %v378
    %v392 = vpop.f32.mrf.mxu0
    %v393 = vadd.f32 0.0, %v392
    %v394 = vpop.f32.mrf.mxu0
    %395 = vdwg.mxu0
    %v396 = vsel %vm192, %v393, -inf
    %397 = vmax.xlane.f32.xlu0 %v396
    %v398 = vpop.xlane.xlu0 %397
    %v399 = vsub.f32 %v393, %v398
    %v400 = vmul.f32 %v399, 1.442695
    %v401 = vpow.pop %v400
    %v402 = vsel %vm192, %v401, 0.0
    %403 = vadd.xlane.f32.xlu0 %v402
    %v404 = vpop.xlane.xlu0 %403
    %v405 = vrcp.pop %v404
    %v406 = vmul.f32 %v404, %v405
    %v407 = vsub.f32 1.0, %v406
    %v408 = vmul.f32 %v405, %v407
    %v409 = vadd.f32 %v405, %v408
    %vm410 = vweird.f32 %v404
    %vm411 = vweird.f32 %v405
    %vm412 = vmor %vm410, %vm411
    %v413 = vsel %vm412, %v405, %v409
    %v414 = vand.u32 2147483647, %v404
    %vm415 = vcmp.eq.f32.partialorder %v414, 8.507059e+37
    %v416 = vand.u32 %v404, 2147483648
    %v417 = vor.u32 1.1754944e-38, %v416
    %v418 = vsel %vm415, %v417, %v413
    %v419 = vmul.f32 %v401, %v418
    %v420 = vpack.c.bf16 %v419, %v419
    %421 = vrot.lane.b32.xlu0 %v171, 72
    %v422 = vpop.permute.xlu0 %421
    %v425 = vsel %vm192, %v420, 0
    %427 = vmatpush.bf16.msra.mxu0 0
    %428 = vmatpush.bf16.msra.mxu0 0
    %429 = vmatpush.bf16.msra.mxu0 0
    %430 = vmatpush.bf16.msra.mxu0 0
    %431 = vmatpush.bf16.msra.mxu0 0
    %432 = vmatpush.bf16.msra.mxu0 0
    %433 = vmatpush.bf16.msra.mxu0 0
    %434 = vmatpush.bf16.msra.mxu0 %v422
    %435 = vmatmul.bf16.gmra.mxu0 %v425
    %v436 = vpop.f32.mrf.mxu0
    %v437 = vadd.f32 0.0, %v436
    %v438 = vpop.f32.mrf.mxu0
    %439 = vdwg.mxu0
    %441 = vrot.lane.b32.xlu0 %v303, 8
    %v442 = vpop.permute.xlu0 %441
    %445 = vrot.lane.b32.xlu0 %v370, 16
    %v446 = vpop.permute.xlu0 %445
    %449 = vrot.lane.b32.xlu0 %v437, 24
    %v450 = vpop.permute.xlu0 %449
    %v452 = vsel %vm172, %v235, %v442
    %v453 = vsel %vm192, %v452, %v446
    %vm454 = vcmask 195584
    %v455 = vsel %vm454, %v453, %v450
    %456 = vst.msk [vmem:[#allocation10] sm:$0xff] %vm105, %v455
    // Predicated region
    $region38: #{tpu_custom_call.1} parent=1 // pred_check
      _
    $region39: #{tpu_custom_call.1} parent=1 // pred_check_branch
      %458 = sbr.rel (0) target = $region41
    $region40: #{tpu_custom_call.1} parent=1 // pred_region
      %460 = vsyncadd [#allocation4], 0
      %s462 = sshll.u32 [#allocation10], 4
      %s463 = int_to_ptr.vmem [resolvable:$true] %s462
      %s464 = sshll.u32 %s5, 4
      %s465 = int_to_ptr.hbm [resolvable:$true] %s464
      %467 = dma.vmem_to_hbm [thread:$0]  %s463, 128, %s465, [#allocation4]
    $region41: #{tpu_custom_call.1} parent=1 // pred_fallthru
      _
    // Predicated region
    $region42: #{tpu_custom_call.1} parent=1 // pred_check
      _
    $region43: #{tpu_custom_call.1} parent=1 // pred_check_branch
      %469 = sbr.rel (0) target = $region45
    $region44: #{tpu_custom_call.1} parent=1 // pred_region
      %471 = dma.done [#allocation4], 128
    $region45: #{tpu_custom_call.1} parent=1 // pred_fallthru
      _
    %472 = vsyncpa [#allocation3], 1
    %473 = vsyncpa [#allocation6], 1
    %474 = vsyncpa [#allocation9], 1
    %475 = vsyncpa [#allocation4], 1

</llo_original>
